<compile_context>
chip_gen: v7x
topology: tpu7x:2x2x1
jax: 0.10.0
libtpu: 0.0.40
codegen_flags: <defaults>
</compile_context>

<pallas_src>
import jax
import jax.numpy as jnp
from jax.experimental import pallas as pl
from jax.experimental.pallas import tpu as pltpu

# CartPole-v1 constants (instead of gym)
STATE_SIZE = 4          # env.observation_space.shape[0]
NUM_ACTIONS = 2         # env.action_space.n
NUM_HIDDEN_UNITS = 128  # num_hidden_units
HEAD_OUT = NUM_ACTIONS + 1  # fused actor (2) + critic (1) head width


def actor_critic_kernel(x_ref, w1_ref, b1_ref, w23_ref, b23_ref, out_ref):
    x = x_ref[...]                                                     # (TB, S)

    # common: Linear + ReLU
    h = jnp.dot(x, w1_ref[...], preferred_element_type=jnp.float32)   # (TB, H)
    h = jnp.maximum(h + b1_ref[...], 0.0)

    # fused actor+critic heads: one matmul -> (TB, NUM_ACTIONS + 1)
    fused = jnp.dot(h, w23_ref[...],
                    preferred_element_type=jnp.float32) + b23_ref[...]

    logits = fused[:, :NUM_ACTIONS]                                    # (TB, A)
    values = fused[:, NUM_ACTIONS:]                                    # (TB, 1)

    # numerically stable softmax over actor logits (exact divide; keep 1e-5 tol)
    m = jnp.max(logits, axis=-1, keepdims=True)
    e = jnp.exp(logits - m)
    probs = e / jnp.sum(e, axis=-1, keepdims=True)

    # single merged output slab: [probs | value]
    out_ref[...] = jnp.concatenate([probs, values], axis=-1)


def actor_critic_forward(x, w1, b1, w23, b23, *, block_batch=None):
    """Runs the fused forward pass. Returns (action_prob (B, A), state_values (B, 1))."""
    B = x.shape[0]

    # batch tile: multiple of 8 sublanes, capped so large batches get a real grid
    if block_batch is None:
        block_batch = min(512, -(-B // 8) * 8)
    block_batch = max(8, -(-block_batch // 8) * 8)

    padded_b = -(-B // block_batch) * block_batch
    if padded_b != B:
        x = jnp.pad(x, ((0, padded_b - B), (0, 0)))

    grid = (padded_b // block_batch,)

    def resident(shape):
        # weights/biases: full array, same block for every grid step (stay in VMEM)
        return pl.BlockSpec(shape, lambda i: (0, 0))

    out = pl.pallas_call(
        actor_critic_kernel,
        out_shape=jax.ShapeDtypeStruct((padded_b, HEAD_OUT), jnp.float32),
        grid=grid,
        in_specs=[
            pl.BlockSpec((block_batch, STATE_SIZE), lambda i: (i, 0)),  # x
            resident(w1.shape),    # (S, H)
            resident(b1.shape),    # (1, H)
            resident(w23.shape),   # (H, A+1)
            resident(b23.shape),   # (1, A+1)
        ],
        out_specs=pl.BlockSpec((block_batch, HEAD_OUT), lambda i: (i, 0)),
        compiler_params=pltpu.CompilerParams(
            dimension_semantics=("parallel",)),
    )(x, w1, b1, w23, b23)

    probs = out[:B, :NUM_ACTIONS]
    values = out[:B, NUM_ACTIONS:]
    return probs, values


def init_params(key):
    """Deterministic init mirroring PyTorch Linear default (uniform +-1/sqrt(fan_in))."""
    ks = jax.random.split(key, 6)

    def lin(kw, kb, fan_in, fan_out):
        bound = 1.0 / jnp.sqrt(jnp.float32(fan_in))
        w = jax.random.uniform(kw, (fan_in, fan_out), jnp.float32, -bound, bound)
        b = jax.random.uniform(kb, (1, fan_out), jnp.float32, -bound, bound)
        return w, b

    w1, b1 = lin(ks[0], ks[1], STATE_SIZE, NUM_HIDDEN_UNITS)
    w2, b2 = lin(ks[2], ks[3], NUM_HIDDEN_UNITS, NUM_ACTIONS)
    w3, b3 = lin(ks[4], ks[5], NUM_HIDDEN_UNITS, 1)
    return w1, b1, w2, b2, w3, b3


def prepare_params(w1, b1, w2, b2, w3, b3):
    """One-time fusion of the actor/critic head weights (done at init, not per call)."""
    w23 = jnp.concatenate([w2, w3], axis=1)   # (H, A+1)
    b23 = jnp.concatenate([b2, b3], axis=1)   # (1, A+1)
    return w1, b1, w23, b23


def reference_forward(x, w1, b1, w2, b2, w3, b3):
    h = jnp.maximum(x @ w1 + b1, 0.0)
    logits = h @ w2 + b2
    probs = jax.nn.softmax(logits, axis=-1)
    values = h @ w3 + b3
    return probs, values


if __name__ == "__main__":
    key = jax.random.PRNGKey(0)
    k_params, k_x = jax.random.split(key)

    raw_params = init_params(k_params)
    fused_params = prepare_params(*raw_params)

    batch = 8
    x = jax.random.normal(k_x, (batch, STATE_SIZE), dtype=jnp.float32)

    probs, values = actor_critic_forward(x, *fused_params)
    jax.block_until_ready((probs, values))

    # sanity check against pure-JAX reference (un-fused weights)
    ref_probs, ref_values = reference_forward(x, *raw_params)
    assert probs.shape == (batch, NUM_ACTIONS)
    assert values.shape == (batch, 1)
    assert jnp.allclose(probs, ref_probs, atol=1e-5, rtol=1e-5)
    assert jnp.allclose(values, ref_values, atol=1e-5, rtol=1e-5)
    assert jnp.allclose(jnp.sum(probs, axis=-1), 1.0, atol=1e-5)

    print("KERNEL_OK")
</pallas_src>

<mosaic_0001>
module attributes {stable_mosaic.version = 11 : i64} {
  func.func @actor_critic_kernel(%arg0: i32, %arg1: memref<8x4xf32, #tpu.memory_space<vmem>>, %arg2: memref<4x128xf32, #tpu.memory_space<vmem>>, %arg3: memref<1x128xf32, #tpu.memory_space<vmem>>, %arg4: memref<128x3xf32, #tpu.memory_space<vmem>>, %arg5: memref<1x3xf32, #tpu.memory_space<vmem>>, %arg6: memref<8x3xf32, #tpu.memory_space<vmem>>) attributes {dimension_semantics = [#tpu.dimension_semantics<parallel>], iteration_bounds = array<i64: 1>, scalar_prefetch = 0 : i64, scratch_operands = 0 : i64, tpu.core_type = #tpu.core_type<tc>, window_params = [{transform_indices = @transform_0, window_bounds = array<i64: 8, 4>}, {pipeline_mode = #tpu.pipeline_mode<synchronous>, transform_indices = @transform_1, window_bounds = array<i64: 4, 128>}, {pipeline_mode = #tpu.pipeline_mode<synchronous>, transform_indices = @transform_2, window_bounds = array<i64: 1, 128>}, {pipeline_mode = #tpu.pipeline_mode<synchronous>, transform_indices = @transform_3, window_bounds = array<i64: 128, 3>}, {pipeline_mode = #tpu.pipeline_mode<synchronous>, transform_indices = @transform_4, window_bounds = array<i64: 1, 3>}, {transform_indices = @transform_5, window_bounds = array<i64: 8, 3>}]} {
    %c0 = arith.constant 0 : index
    %c0_0 = arith.constant 0 : index
    %0 = vector.load %arg1[%c0, %c0_0] : memref<8x4xf32, #tpu.memory_space<vmem>>, vector<8x4xf32>
    %c0_1 = arith.constant 0 : index
    %c0_2 = arith.constant 0 : index
    %1 = vector.load %arg2[%c0_1, %c0_2] : memref<4x128xf32, #tpu.memory_space<vmem>>, vector<4x128xf32>
    %cst = arith.constant dense<0.000000e+00> : vector<8x128xf32>
    %2 = tpu.matmul %0, %1, %cst {dimension_numbers = #tpu.dot_dimension_numbers<[1], [0], [0], [1], [0, 0, 1, 1], [], []>} : vector<8x4xf32>, vector<4x128xf32>, vector<8x128xf32> -> vector<8x128xf32>
    %c0_3 = arith.constant 0 : index
    %c0_4 = arith.constant 0 : index
    %3 = vector.load %arg3[%c0_3, %c0_4] : memref<1x128xf32, #tpu.memory_space<vmem>>, vector<1x128xf32>
    %4 = vector.broadcast %3 : vector<1x128xf32> to vector<8x128xf32>
    %5 = arith.addf %2, %4 : vector<8x128xf32>
    %cst_5 = arith.constant 0.000000e+00 : f32
    %6 = vector.broadcast %cst_5 : f32 to vector<8x128xf32>
    %7 = arith.maximumf %5, %6 : vector<8x128xf32>
    %c0_6 = arith.constant 0 : index
    %c0_7 = arith.constant 0 : index
    %8 = vector.load %arg4[%c0_6, %c0_7] : memref<128x3xf32, #tpu.memory_space<vmem>>, vector<128x3xf32>
    %cst_8 = arith.constant dense<0.000000e+00> : vector<8x3xf32>
    %9 = tpu.matmul %7, %8, %cst_8 {dimension_numbers = #tpu.dot_dimension_numbers<[1], [0], [0], [1], [0, 0, 1, 1], [], []>} : vector<8x128xf32>, vector<128x3xf32>, vector<8x3xf32> -> vector<8x3xf32>
    %c0_9 = arith.constant 0 : index
    %c0_10 = arith.constant 0 : index
    %10 = vector.load %arg5[%c0_9, %c0_10] : memref<1x3xf32, #tpu.memory_space<vmem>>, vector<1x3xf32>
    %11 = vector.broadcast %10 : vector<1x3xf32> to vector<8x3xf32>
    %12 = arith.addf %9, %11 : vector<8x3xf32>
    %13 = vector.extract_strided_slice %12 {offsets = [0, 0], sizes = [8, 2], strides = [1, 1]} : vector<8x3xf32> to vector<8x2xf32>
    %14 = vector.extract_strided_slice %12 {offsets = [0, 2], sizes = [8, 1], strides = [1, 1]} : vector<8x3xf32> to vector<8x1xf32>
    %cst_11 = arith.constant dense<0xFF800000> : vector<8xf32>
    %15 = vector.multi_reduction <maximumf>, %13, %cst_11 [1] : vector<8x2xf32> to vector<8xf32>
    %16 = vector.shape_cast %15 : vector<8xf32> to vector<8x1xf32>
    %17 = vector.broadcast %16 : vector<8x1xf32> to vector<8x2xf32>
    %18 = arith.subf %13, %17 : vector<8x2xf32>
    %19 = math.exp %18 : vector<8x2xf32>
    %cst_12 = arith.constant dense<0.000000e+00> : vector<8xf32>
    %20 = vector.multi_reduction <add>, %19, %cst_12 [1] : vector<8x2xf32> to vector<8xf32>
    %21 = vector.shape_cast %20 : vector<8xf32> to vector<8x1xf32>
    %22 = vector.broadcast %21 : vector<8x1xf32> to vector<8x2xf32>
    %23 = arith.divf %19, %22 : vector<8x2xf32>
    %24 = tpu.concatenate %23, %14 in 1 : vector<8x2xf32>, vector<8x1xf32> -> vector<8x3xf32>
    %c0_13 = arith.constant 0 : index
    %c0_14 = arith.constant 0 : index
    %25 = vector.load %arg6[%c0_13, %c0_14] : memref<8x3xf32, #tpu.memory_space<vmem>>, vector<8x3xf32>
    tpu.vector_store %arg6[%c0_13, %c0_14], %24 {strides = array<i32>} : memref<8x3xf32, #tpu.memory_space<vmem>>, vector<8x3xf32>,
    return
  }
  func.func @transform_0(%arg0: i32) -> (i32, i32) {
    %c0_i32 = arith.constant 0 : i32
    %c0_i32_0 = arith.constant 0 : i32
    return %arg0, %c0_i32 : i32, i32
  }
  func.func @transform_1(%arg0: i32) -> (i32, i32) {
    %c0_i32 = arith.constant 0 : i32
    %c0_i32_0 = arith.constant 0 : i32
    %c0_i32_1 = arith.constant 0 : i32
    return %c0_i32, %c0_i32_0 : i32, i32
  }
  func.func @transform_2(%arg0: i32) -> (i32, i32) {
    %c0_i32 = arith.constant 0 : i32
    %c0_i32_0 = arith.constant 0 : i32
    %c0_i32_1 = arith.constant 0 : i32
    return %c0_i32, %c0_i32_0 : i32, i32
  }
  func.func @transform_3(%arg0: i32) -> (i32, i32) {
    %c0_i32 = arith.constant 0 : i32
    %c0_i32_0 = arith.constant 0 : i32
    %c0_i32_1 = arith.constant 0 : i32
    return %c0_i32, %c0_i32_0 : i32, i32
  }
  func.func @transform_4(%arg0: i32) -> (i32, i32) {
    %c0_i32 = arith.constant 0 : i32
    %c0_i32_0 = arith.constant 0 : i32
    %c0_i32_1 = arith.constant 0 : i32
    return %c0_i32, %c0_i32_0 : i32, i32
  }
  func.func @transform_5(%arg0: i32) -> (i32, i32) {
    %c0_i32 = arith.constant 0 : i32
    %c0_i32_0 = arith.constant 0 : i32
    return %arg0, %c0_i32 : i32, i32
  }
}

</mosaic_0001>

<llo_original>
// kernel: tpu_custom_call.1
$region0: #{tpu_custom_call.1}
  #allocation0 [shape = 'u32[]', space=smem, size = 0x4, offset = 0x4, fixed_abs, tag = 'smem constant byte address 0x4 - core index']
  #allocation1 [shape = 'u32[144,128]{1,0:T(1,128)}', space=vmem, size = 0x12000, scoped, tag = 'internal scratch']
  %s0 = inlined_call_operand.vmem [shape: f32[8,4], index: 0, kind: input, shape index: {}]
  %s1 = inlined_call_operand.vmem [shape: f32[4,128], index: 1, kind: input, shape index: {}]
  %s2 = inlined_call_operand.vmem [shape: f32[1,128], index: 2, kind: input, shape index: {}]
  %s3 = inlined_call_operand.vmem [shape: f32[128,3], index: 3, kind: input, shape index: {}]
  %s4 = inlined_call_operand.vmem [shape: f32[1,3], index: 4, kind: input, shape index: {}]
  %s5 = inlined_call_operand.vmem [shape: f32[8,3], index: 5, kind: output, shape index: {}]
  %s6 = sld [smem:[#allocation0]]
  $region30: #{tpu_custom_call.1} parent=0
    _
  %s8 = ssub.s32 1, %s6
  %s9 = scalar_select 0, %s8, %s6
  // Predicated region
  $region2: #{tpu_custom_call.1} parent=0 // pred_check
    _
  $region3: #{tpu_custom_call.1} parent=0 // pred_check_branch
    %11 = sbr.rel (0) target = $region5
  $region4: #{tpu_custom_call.1} parent=0 // pred_region
    _
  $region5: #{tpu_custom_call.1} parent=0 // pred_fallthru
    _
  // Predicated region
  $region6: #{tpu_custom_call.1} parent=0 // pred_check
    _
  $region7: #{tpu_custom_call.1} parent=0 // pred_check_branch
    %13 = sbr.rel (0) target = $region9
  $region8: #{tpu_custom_call.1} parent=0 // pred_region
    _
  $region9: #{tpu_custom_call.1} parent=0 // pred_fallthru
    _
  // Predicated region
  $region10: #{tpu_custom_call.1} parent=0 // pred_check
    _
  $region11: #{tpu_custom_call.1} parent=0 // pred_check_branch
    %15 = sbr.rel (0) target = $region13
  $region12: #{tpu_custom_call.1} parent=0 // pred_region
    _
  $region13: #{tpu_custom_call.1} parent=0 // pred_fallthru
    _
  // Predicated region
  $region14: #{tpu_custom_call.1} parent=0 // pred_check
    _
  $region15: #{tpu_custom_call.1} parent=0 // pred_check_branch
    %17 = sbr.rel (0) target = $region17
  $region16: #{tpu_custom_call.1} parent=0 // pred_region
    _
  $region17: #{tpu_custom_call.1} parent=0 // pred_fallthru
    _
  // Predicated region
  $region18: #{tpu_custom_call.1} parent=0 // pred_check
    _
  $region19: #{tpu_custom_call.1} parent=0 // pred_check_branch
    %19 = sbr.rel (0) target = $region21
  $region20: #{tpu_custom_call.1} parent=0 // pred_region
    _
  $region21: #{tpu_custom_call.1} parent=0 // pred_fallthru
    _
  %v20 = vld [vmem:[%s0] sm:$0xff]
  %v21 = vld [vmem:[%s1] sm:$0xf]
  %v22 = vld [vmem:[%s2] sm:$0x1]
  %v24 = vlaneseq
  %v25 = vshrl.u32 %v24, 7
  %v26 = vsub.s32 0, %v25
  %v27 = vrot.slane %v22, %v26
  %vm29 = vcmask 31744
  %v31 = vsel %vm29, %v20, 0
  %vm33 = vcmask 1043456
  %v35 = vsel %vm33, %v21, 0
  %37 = vmatprep.subr.mxu0 0.0
  %38 = vmatpush1.msra.mxu0 %v35
  %39 = vmatprep.subr.mxu0 0.0
  %40 = vmatpush1.msra.mxu0 0.0
  %41 = vmatprep.subr.mxu0 0.0
  %42 = vmatpush1.msra.mxu0 0.0
  %43 = vmatprep.subr.mxu0 0.0
  %44 = vmatpush1.msra.mxu0 0.0
  %45 = vmatprep.subr.mxu0 0.0
  %46 = vmatpush1.msra.mxu0 0.0
  %47 = vmatprep.subr.mxu0 0.0
  %48 = vmatpush1.msra.mxu0 0.0
  %49 = vmatprep.subr.mxu0 0.0
  %50 = vmatpush1.msra.mxu0 0.0
  %51 = vmatprep.subr.mxu0 0.0
  %52 = vmatpush1.msra.mxu0 0.0
  %53 = vmatprep.subr.mxu0 0.0
  %54 = vmatpush1.msra.mxu0 0.0
  %55 = vmatprep.subr.mxu0 0.0
  %56 = vmatpush1.msra.mxu0 0.0
  %57 = vmatprep.subr.mxu0 0.0
  %58 = vmatpush1.msra.mxu0 0.0
  %59 = vmatprep.subr.mxu0 0.0
  %60 = vmatpush1.msra.mxu0 0.0
  %61 = vmatprep.subr.mxu0 0.0
  %62 = vmatpush1.msra.mxu0 0.0
  %63 = vmatprep.subr.mxu0 0.0
  %64 = vmatpush1.msra.mxu0 0.0
  %65 = vmatprep.subr.mxu0 0.0
  %66 = vmatpush1.msra.mxu0 0.0
  %67 = vmatprep.subr.mxu0 0.0
  %68 = vmatpush1.msra.mxu0 0.0
  %69 = vmatprep.subr.mxu0 0.0
  %70 = vmatpush1.msra.mxu0 0.0
  %71 = vmatprep.subr.mxu0 0.0
  %72 = vmatpush1.msra.mxu0 0.0
  %73 = vmatprep.subr.mxu0 0.0
  %74 = vmatpush1.msra.mxu0 0.0
  %75 = vmatprep.subr.mxu0 0.0
  %76 = vmatpush1.msra.mxu0 0.0
  %77 = vmatprep.subr.mxu0 0.0
  %78 = vmatpush1.msra.mxu0 0.0
  %79 = vmatprep.subr.mxu0 0.0
  %80 = vmatpush1.msra.mxu0 0.0
  %81 = vmatprep.subr.mxu0 0.0
  %82 = vmatpush1.msra.mxu0 0.0
  %83 = vmatprep.subr.mxu0 0.0
  %84 = vmatpush1.msra.mxu0 0.0
  %85 = vmatprep.subr.mxu0 0.0
  %86 = vmatpush1.msra.mxu0 0.0
  %87 = vmatprep.subr.mxu0 0.0
  %88 = vmatpush1.msra.mxu0 0.0
  %89 = vmatprep.subr.mxu0 0.0
  %90 = vmatpush1.msra.mxu0 0.0
  %91 = vmatprep.subr.mxu0 0.0
  %92 = vmatpush1.msra.mxu0 0.0
  %93 = vmatprep.subr.mxu0 0.0
  %94 = vmatpush1.msra.mxu0 0.0
  %95 = vmatprep.subr.mxu0 0.0
  %96 = vmatpush1.msra.mxu0 0.0
  %97 = vmatprep.subr.mxu0 0.0
  %98 = vmatpush1.msra.mxu0 0.0
  %99 = vmatprep.subr.mxu0 0.0
  %100 = vmatpush1.msra.mxu0 0.0
  %101 = vmatprep.mubr.f32.mxu0 0.0
  %102 = vmatmul.mubr.f32.gmra.mrb[0].mxu0 %v31
  %v103 = vpop.f32.mrb[0].mxu0
  %v104 = vadd.f32 %v27, %v103
  %v105 = vpop.f32.mrb[0].mxu0
  %106 = vdwg.mxu0
  %v107 = vmax.f32 %v104, 0.0
  %v108 = vld [vmem:[%s3] sm:$0xff]
  %v109 = vld [vmem:[%s3 + $0x8] sm:$0xff]
  %v110 = vld [vmem:[%s3 + $0x10] sm:$0xff]
  %v111 = vld [vmem:[%s3 + $0x18] sm:$0xff]
  %v112 = vld [vmem:[%s3 + $0x20] sm:$0xff]
  %v113 = vld [vmem:[%s3 + $0x28] sm:$0xff]
  %v114 = vld [vmem:[%s3 + $0x30] sm:$0xff]
  %v115 = vld [vmem:[%s3 + $0x38] sm:$0xff]
  %v116 = vld [vmem:[%s3 + $0x40] sm:$0xff]
  %v117 = vld [vmem:[%s3 + $0x48] sm:$0xff]
  %v118 = vld [vmem:[%s3 + $0x50] sm:$0xff]
  %v119 = vld [vmem:[%s3 + $0x58] sm:$0xff]
  %v120 = vld [vmem:[%s3 + $0x60] sm:$0xff]
  %v121 = vld [vmem:[%s3 + $0x68] sm:$0xff]
  %v122 = vld [vmem:[%s3 + $0x70] sm:$0xff]
  %v123 = vld [vmem:[%s3 + $0x78] sm:$0xff]
  %v124 = vld [vmem:[%s4] sm:$0x1]
  %v126 = vlaneseq
  %v127 = vshrl.u32 %v126, 7
  %v128 = vsub.s32 0, %v127
  %v129 = vrot.slane %v124, %v128
  %131 = vmatprep.subr.mxu0 0.0
  %132 = vmatpush1.msra.mxu0 %v108
  %133 = vmatprep.subr.mxu0 0.0
  %134 = vmatpush1.msra.mxu0 %v109
  %135 = vmatprep.subr.mxu0 0.0
  %136 = vmatpush1.msra.mxu0 %v110
  %137 = vmatprep.subr.mxu0 0.0
  %138 = vmatpush1.msra.mxu0 %v111
  %139 = vmatprep.subr.mxu0 0.0
  %140 = vmatpush1.msra.mxu0 %v112
  %141 = vmatprep.subr.mxu0 0.0
  %142 = vmatpush1.msra.mxu0 %v113
  %143 = vmatprep.subr.mxu0 0.0
  %144 = vmatpush1.msra.mxu0 %v114
  %145 = vmatprep.subr.mxu0 0.0
  %146 = vmatpush1.msra.mxu0 %v115
  %147 = vmatprep.subr.mxu0 0.0
  %148 = vmatpush1.msra.mxu0 %v116
  %149 = vmatprep.subr.mxu0 0.0
  %150 = vmatpush1.msra.mxu0 %v117
  %151 = vmatprep.subr.mxu0 0.0
  %152 = vmatpush1.msra.mxu0 %v118
  %153 = vmatprep.subr.mxu0 0.0
  %154 = vmatpush1.msra.mxu0 %v119
  %155 = vmatprep.subr.mxu0 0.0
  %156 = vmatpush1.msra.mxu0 %v120
  %157 = vmatprep.subr.mxu0 0.0
  %158 = vmatpush1.msra.mxu0 %v121
  %159 = vmatprep.subr.mxu0 0.0
  %160 = vmatpush1.msra.mxu0 %v122
  %161 = vmatprep.subr.mxu0 0.0
  %162 = vmatpush1.msra.mxu0 %v123
  %163 = vmatprep.subr.mxu0 0.0
  %164 = vmatpush1.msra.mxu0 0.0
  %165 = vmatprep.subr.mxu0 0.0
  %166 = vmatpush1.msra.mxu0 0.0
  %167 = vmatprep.subr.mxu0 0.0
  %168 = vmatpush1.msra.mxu0 0.0
  %169 = vmatprep.subr.mxu0 0.0
  %170 = vmatpush1.msra.mxu0 0.0
  %171 = vmatprep.subr.mxu0 0.0
  %172 = vmatpush1.msra.mxu0 0.0
  %173 = vmatprep.subr.mxu0 0.0
  %174 = vmatpush1.msra.mxu0 0.0
  %175 = vmatprep.subr.mxu0 0.0
  %176 = vmatpush1.msra.mxu0 0.0
  %177 = vmatprep.subr.mxu0 0.0
  %178 = vmatpush1.msra.mxu0 0.0
  %179 = vmatprep.subr.mxu0 0.0
  %180 = vmatpush1.msra.mxu0 0.0
  %181 = vmatprep.subr.mxu0 0.0
  %182 = vmatpush1.msra.mxu0 0.0
  %183 = vmatprep.subr.mxu0 0.0
  %184 = vmatpush1.msra.mxu0 0.0
  %185 = vmatprep.subr.mxu0 0.0
  %186 = vmatpush1.msra.mxu0 0.0
  %187 = vmatprep.subr.mxu0 0.0
  %188 = vmatpush1.msra.mxu0 0.0
  %189 = vmatprep.subr.mxu0 0.0
  %190 = vmatpush1.msra.mxu0 0.0
  %191 = vmatprep.subr.mxu0 0.0
  %192 = vmatpush1.msra.mxu0 0.0
  %193 = vmatprep.subr.mxu0 0.0
  %194 = vmatpush1.msra.mxu0 0.0
  %195 = vmatprep.mubr.f32.mxu0 0.0
  %196 = vmatmul.mubr.f32.gmra.mrb[0].mxu0 %v107
  %v197 = vpop.f32.mrb[0].mxu0
  %v198 = vadd.f32 %v129, %v197
  %v199 = vpop.f32.mrb[0].mxu0
  %200 = vdwg.mxu0
  %vm201 = vcmask 15360
  %v202 = vsel %vm201, %v198, -inf
  %203 = vmax.xlane.f32.xlu0 %v202
  %v204 = vpop.xlane.xlu0 %203
  %v205 = vsub.f32 %v198, %v204
  %v206 = vmul.f32 %v205, 1.442695
  %v207 = vpow.pop %v206
  %v208 = vsel %vm201, %v207, 0.0
  %209 = vadd.xlane.f32.xlu0 %v208
  %v210 = vpop.xlane.xlu0 %209
  %v211 = vrcp.pop %v210
  %v212 = vmul.f32 %v207, %v211
  %v213 = vsel %vm201, %v212, %v198
  %vm214 = vcmask 23552
  %215 = vst.msk [vmem:[%s5] sm:$0xff] %vm214, %v213
  // Predicated region
  $region22: #{tpu_custom_call.1} parent=0 // pred_check
    _
  $region23: #{tpu_custom_call.1} parent=0 // pred_check_branch
    %217 = sbr.rel (0) target = $region25
  $region24: #{tpu_custom_call.1} parent=0 // pred_region
    _
  $region25: #{tpu_custom_call.1} parent=0 // pred_fallthru
    _
  // Predicated region
  $region26: #{tpu_custom_call.1} parent=0 // pred_check
    _
  $region27: #{tpu_custom_call.1} parent=0 // pred_check_branch
    %219 = sbr.rel (0) target = $region29
  $region28: #{tpu_custom_call.1} parent=0 // pred_region
    _
  $region29: #{tpu_custom_call.1} parent=0 // pred_fallthru
    _

</llo_original>
